<compile_context>
chip_gen: v7x
topology: tpu7x:2x2x1
jax: 0.10.0
libtpu: 0.0.40
codegen_flags: <defaults>
</compile_context>

<pallas_src>
import jax
import jax.numpy as jnp
from jax.experimental import pallas as pl
from jax.experimental.pallas import tpu as pltpu

_EPS = 1e-12


# ----------------------------- fused kernel -------------------------------- #

def _fused_forward_kernel(
    x_img_ref, w_img_ref, b_img_ref,
    tokens_ref, tok_embed_ref, w_cap_ref, b_cap_ref,
    w_dec1_ref, b_dec1_ref, w_dec2_ref, b_dec2_ref,
    z_img_ref, z_cap_ref, recon_ref,
):
    f32 = jnp.float32
    bf16 = jnp.bfloat16

    # ---- image branch: z_images = l2_normalize(x @ W_img + b_img) --------- #
    zi = jnp.dot(x_img_ref[...], w_img_ref[...], preferred_element_type=f32)
    zi = zi + b_img_ref[...]
    inv_i = jax.lax.rsqrt(jnp.sum(zi * zi, axis=-1, keepdims=True) + _EPS)
    z_img_ref[...] = (zi * inv_i).astype(z_img_ref.dtype)

    # ---- caption branch ---------------------------------------------------- #
    # Mean-pool of gathered embeddings expressed as (one-hot counts / L) @ E:
    # keeps the "gather" on the MXU, avoids materializing [B, L, E] and avoids
    # any dynamic gather inside the kernel.  Static unroll over L (small).
    tok = tokens_ref[...]                                    # [B, L] int32
    B, L = tok.shape
    V = tok_embed_ref.shape[0]
    vocab_iota = jax.lax.broadcasted_iota(jnp.int32, (B, V), 1)
    counts = jnp.zeros((B, V), f32)
    for l in range(L):                                       # L is static & tiny
        counts = counts + (tok[:, l:l + 1] == vocab_iota).astype(f32)
    pooled_w = (counts * (1.0 / L)).astype(bf16)             # counts/L exact in bf16
    pooled = jnp.dot(pooled_w, tok_embed_ref[...], preferred_element_type=f32)
    zc = jnp.dot(pooled.astype(bf16), w_cap_ref[...], preferred_element_type=f32)
    zc = zc + b_cap_ref[...]
    inv_c = jax.lax.rsqrt(jnp.sum(zc * zc, axis=-1, keepdims=True) + _EPS)
    zc = zc * inv_c
    z_cap_ref[...] = zc.astype(z_cap_ref.dtype)

    # ---- target decoder: relu(zc @ W1 + b1) @ W2 + b2 ---------------------- #
    # zc stays in vregs (no HBM round-trip between "modules").
    h = jnp.dot(zc.astype(bf16), w_dec1_ref[...], preferred_element_type=f32)
    h = jnp.maximum(h + b_dec1_ref[...], 0.0)
    r = jnp.dot(h.astype(bf16), w_dec2_ref[...], preferred_element_type=f32)
    recon_ref[...] = (r + b_dec2_ref[...]).astype(recon_ref.dtype)


# ----------------------------- wrappers ------------------------------------ #

def fused_forward(x_img, tokens, p):
    """One pallas_call for the whole hot path. Everything fits VMEM comfortably
    at these sizes (<1 MiB), so whole arrays are resident (single block)."""
    B = x_img.shape[0]
    D = p["w_img"].shape[1]
    R = p["w_dec2"].shape[1]
    vmem = pl.BlockSpec(memory_space=pltpu.MemorySpace.VMEM)
    return pl.pallas_call(
        _fused_forward_kernel,
        out_shape=(
            jax.ShapeDtypeStruct((B, D), jnp.float32),   # z_images
            jax.ShapeDtypeStruct((B, D), jnp.float32),   # z_captions
            jax.ShapeDtypeStruct((B, R), jnp.float32),   # reconstructions
        ),
        in_specs=[vmem] * 11,
        out_specs=(vmem, vmem, vmem),
    )(
        x_img, p["w_img"], p["b_img"],
        tokens, p["tok_embed"], p["w_cap"], p["b_cap"],
        p["w_dec1"], p["b_dec1"], p["w_dec2"], p["b_dec2"],
    )


def prepare_params(raw, hidden_pad=128):
    """One-time cast of weights to bf16 (halves HBM bytes for w_img, native MXU
    dtype) and zero-pad the decoder hidden dim to 128 lanes (exact: padded
    hidden units see zero weight + zero bias -> relu(0)=0 -> zero contribution)."""
    h = raw["w_dec1"].shape[1]
    pad = hidden_pad - h
    return {
        "w_img": raw["w_img"].astype(jnp.bfloat16),
        "b_img": raw["b_img"].astype(jnp.float32),
        "tok_embed": raw["tok_embed"].astype(jnp.bfloat16),
        "w_cap": raw["w_cap"].astype(jnp.bfloat16),
        "b_cap": raw["b_cap"].astype(jnp.float32),
        "w_dec1": jnp.pad(raw["w_dec1"], ((0, 0), (0, pad))).astype(jnp.bfloat16),
        "b_dec1": jnp.pad(raw["b_dec1"], ((0, 0), (0, pad))).astype(jnp.float32),
        "w_dec2": jnp.pad(raw["w_dec2"], ((0, pad), (0, 0))).astype(jnp.bfloat16),
        "b_dec2": raw["b_dec2"].astype(jnp.float32),
        "log_logit_scale": raw["log_logit_scale"],
    }


def model_forward(images, tokens, params):
    """Mirror of Model.forward: returns (z_images, z_captions, logit_scale, recon)."""
    B = images.shape[0]
    x_img = images.reshape(B, -1).astype(jnp.bfloat16)       # glue: flatten NCHW
    z_images, z_captions, recon = fused_forward(x_img, tokens, params)
    logit_scale = jnp.exp(params["log_logit_scale"])          # scalar, like CLIP
    return z_images, z_captions, logit_scale, recon
    # TODO(synk): config-driven backbone selection (CLIP/VSE/BASE), .to(device)
    # and requires_grad plumbing are host-side/training concerns with no kernel
    # equivalent; forward semantics above use the synthetic encoders.


# pure-JAX reference (f32 math on the same prepared params) for a sanity check
def _reference_forward(images, tokens, p):
    B = images.shape[0]
    x = images.reshape(B, -1).astype(jnp.float32)
    zi = x @ p["w_img"].astype(jnp.float32) + p["b_img"]
    zi = zi / jnp.sqrt(jnp.sum(zi * zi, -1, keepdims=True) + _EPS)
    emb = jnp.take(p["tok_embed"].astype(jnp.float32), tokens, axis=0)
    pooled = emb.mean(axis=1)
    zc = pooled @ p["w_cap"].astype(jnp.float32) + p["b_cap"]
    zc = zc / jnp.sqrt(jnp.sum(zc * zc, -1, keepdims=True) + _EPS)
    h = jnp.maximum(zc @ p["w_dec1"].astype(jnp.float32) + p["b_dec1"], 0.0)
    r = h @ p["w_dec2"].astype(jnp.float32) + p["b_dec2"]
    return zi, zc, r


# ----------------------------- main ----------------------------------------- #

if __name__ == "__main__":
    # Small config consistent with the module's forward
    B, C, H, W = 2, 4, 16, 16        # images: NCHW
    L = 8                            # token sequence length
    VOCAB, E = 64, 64                # token embedding
    D = 128                          # image_caption_encoder.embed_dim
    HIDDEN = 64                      # target_decoder.hidden_features
    RECON = 128                      # target_decoder.reconstruction_dim

    key = jax.random.PRNGKey(0)
    ks = jax.random.split(key, 10)

    images = jax.random.normal(ks[0], (B, C, H, W), jnp.float32)
    tokens = jax.random.randint(ks[1], (B, L), 0, VOCAB, jnp.int32)

    raw_params = {
        "w_img": jax.random.normal(ks[2], (C * H * W, D), jnp.float32) * 0.02,
        "b_img": jnp.zeros((1, D), jnp.float32),
        "tok_embed": jax.random.normal(ks[3], (VOCAB, E), jnp.float32) * 0.02,
        "w_cap": jax.random.normal(ks[4], (E, D), jnp.float32) * 0.02,
        "b_cap": jnp.zeros((1, D), jnp.float32),
        "log_logit_scale": jnp.float32(jnp.log(1.0 / 0.07)),
        "w_dec1": jax.random.normal(ks[5], (D, HIDDEN), jnp.float32) * 0.02,
        "b_dec1": jnp.zeros((1, HIDDEN), jnp.float32),
        "w_dec2": jax.random.normal(ks[6], (HIDDEN, RECON), jnp.float32) * 0.02,
        "b_dec2": jnp.zeros((1, RECON), jnp.float32),
    }
    params = prepare_params(raw_params, hidden_pad=128)

    z_images, z_captions, logit_scale, recon = model_forward(images, tokens, params)
    jax.block_until_ready((z_images, z_captions, logit_scale, recon))

    # shape + unit-norm sanity (normalization happens in f32 inside the kernel)
    assert z_images.shape == (B, D) and z_captions.shape == (B, D)
    assert recon.shape == (B, RECON)
    assert jnp.allclose(jnp.linalg.norm(z_images, axis=-1), 1.0, atol=1e-4)
    assert jnp.allclose(jnp.linalg.norm(z_captions, axis=-1), 1.0, atol=1e-4)

    # loose numerical check vs pure-JAX reference (bf16 MXU inputs -> ~0.4% rel)
    zi_ref, zc_ref, r_ref = _reference_forward(images, tokens, params)
    assert jnp.allclose(z_images, zi_ref, rtol=2e-2, atol=2e-2)
    assert jnp.allclose(z_captions, zc_ref, rtol=2e-2, atol=2e-2)
    assert jnp.allclose(recon, r_ref, rtol=2e-2, atol=2e-2)
    assert bool(jnp.isfinite(recon).all())

    print("KERNEL_OK")
</pallas_src>

<mosaic_0001>
module attributes {stable_mosaic.version = 11 : i64} {
  func.func @_fused_forward_kernel(%arg0: memref<2x1024xbf16, #tpu.memory_space<vmem>>, %arg1: memref<1024x128xbf16, #tpu.memory_space<vmem>>, %arg2: memref<1x128xf32, #tpu.memory_space<vmem>>, %arg3: memref<2x8xi32, #tpu.memory_space<vmem>>, %arg4: memref<64x64xbf16, #tpu.memory_space<vmem>>, %arg5: memref<64x128xbf16, #tpu.memory_space<vmem>>, %arg6: memref<1x128xf32, #tpu.memory_space<vmem>>, %arg7: memref<128x128xbf16, #tpu.memory_space<vmem>>, %arg8: memref<1x128xf32, #tpu.memory_space<vmem>>, %arg9: memref<128x128xbf16, #tpu.memory_space<vmem>>, %arg10: memref<1x128xf32, #tpu.memory_space<vmem>>, %arg11: memref<2x128xf32, #tpu.memory_space<vmem>>, %arg12: memref<2x128xf32, #tpu.memory_space<vmem>>, %arg13: memref<2x128xf32, #tpu.memory_space<vmem>>) attributes {dimension_semantics = [], scalar_prefetch = 0 : i64, scratch_operands = 0 : i64, tpu.core_type = #tpu.core_type<tc>} {
    %c0 = arith.constant 0 : index
    %c0_0 = arith.constant 0 : index
    %0 = vector.load %arg0[%c0, %c0_0] : memref<2x1024xbf16, #tpu.memory_space<vmem>>, vector<2x1024xbf16>
    %c0_1 = arith.constant 0 : index
    %c0_2 = arith.constant 0 : index
    %1 = vector.load %arg1[%c0_1, %c0_2] : memref<1024x128xbf16, #tpu.memory_space<vmem>>, vector<1024x128xbf16>
    %cst = arith.constant dense<0.000000e+00> : vector<2x128xf32>
    %2 = tpu.matmul %0, %1, %cst {dimension_numbers = #tpu.dot_dimension_numbers<[1], [0], [0], [1], [0, 0, 1, 1], [], []>} : vector<2x1024xbf16>, vector<1024x128xbf16>, vector<2x128xf32> -> vector<2x128xf32>
    %c0_3 = arith.constant 0 : index
    %c0_4 = arith.constant 0 : index
    %3 = vector.load %arg2[%c0_3, %c0_4] : memref<1x128xf32, #tpu.memory_space<vmem>>, vector<1x128xf32>
    %4 = vector.broadcast %3 : vector<1x128xf32> to vector<2x128xf32>
    %5 = arith.addf %2, %4 : vector<2x128xf32>
    %6 = arith.mulf %5, %5 : vector<2x128xf32>
    %cst_5 = arith.constant dense<0.000000e+00> : vector<2xf32>
    %7 = vector.multi_reduction <add>, %6, %cst_5 [1] : vector<2x128xf32> to vector<2xf32>
    %8 = vector.shape_cast %7 : vector<2xf32> to vector<2x1xf32>
    %cst_6 = arith.constant 9.99999996E-13 : f32
    %9 = vector.broadcast %cst_6 : f32 to vector<2x1xf32>
    %10 = arith.addf %8, %9 : vector<2x1xf32>
    %11 = math.rsqrt %10 : vector<2x1xf32>
    %12 = vector.broadcast %11 : vector<2x1xf32> to vector<2x128xf32>
    %13 = arith.mulf %5, %12 : vector<2x128xf32>
    %c0_7 = arith.constant 0 : index
    %c0_8 = arith.constant 0 : index
    %14 = vector.load %arg11[%c0_7, %c0_8] : memref<2x128xf32, #tpu.memory_space<vmem>>, vector<2x128xf32>
    tpu.vector_store %arg11[%c0_7, %c0_8], %13 {strides = array<i32>} : memref<2x128xf32, #tpu.memory_space<vmem>>, vector<2x128xf32>,
    %c0_9 = arith.constant 0 : index
    %c0_10 = arith.constant 0 : index
    %15 = vector.load %arg3[%c0_9, %c0_10] : memref<2x8xi32, #tpu.memory_space<vmem>>, vector<2x8xi32>
    %16 = tpu.iota {dimensions = array<i32: 1>} : vector<2x64xi32>
    %cst_11 = arith.constant 0.000000e+00 : f32
    %17 = vector.broadcast %cst_11 : f32 to vector<2x64xf32>
    %18 = vector.extract_strided_slice %15 {offsets = [0, 0], sizes = [2, 1], strides = [1, 1]} : vector<2x8xi32> to vector<2x1xi32>
    %19 = vector.broadcast %18 : vector<2x1xi32> to vector<2x64xi32>
    %20 = arith.cmpi eq, %19, %16 : vector<2x64xi32>
    %21 = arith.extui %20 : vector<2x64xi1> to vector<2x64xi32>
    %22 = arith.sitofp %21 : vector<2x64xi32> to vector<2x64xf32>
    %23 = arith.addf %17, %22 : vector<2x64xf32>
    %24 = vector.extract_strided_slice %15 {offsets = [0, 1], sizes = [2, 1], strides = [1, 1]} : vector<2x8xi32> to vector<2x1xi32>
    %25 = vector.broadcast %24 : vector<2x1xi32> to vector<2x64xi32>
    %26 = arith.cmpi eq, %25, %16 : vector<2x64xi32>
    %27 = arith.extui %26 : vector<2x64xi1> to vector<2x64xi32>
    %28 = arith.sitofp %27 : vector<2x64xi32> to vector<2x64xf32>
    %29 = arith.addf %23, %28 : vector<2x64xf32>
    %30 = vector.extract_strided_slice %15 {offsets = [0, 2], sizes = [2, 1], strides = [1, 1]} : vector<2x8xi32> to vector<2x1xi32>
    %31 = vector.broadcast %30 : vector<2x1xi32> to vector<2x64xi32>
    %32 = arith.cmpi eq, %31, %16 : vector<2x64xi32>
    %33 = arith.extui %32 : vector<2x64xi1> to vector<2x64xi32>
    %34 = arith.sitofp %33 : vector<2x64xi32> to vector<2x64xf32>
    %35 = arith.addf %29, %34 : vector<2x64xf32>
    %36 = vector.extract_strided_slice %15 {offsets = [0, 3], sizes = [2, 1], strides = [1, 1]} : vector<2x8xi32> to vector<2x1xi32>
    %37 = vector.broadcast %36 : vector<2x1xi32> to vector<2x64xi32>
    %38 = arith.cmpi eq, %37, %16 : vector<2x64xi32>
    %39 = arith.extui %38 : vector<2x64xi1> to vector<2x64xi32>
    %40 = arith.sitofp %39 : vector<2x64xi32> to vector<2x64xf32>
    %41 = arith.addf %35, %40 : vector<2x64xf32>
    %42 = vector.extract_strided_slice %15 {offsets = [0, 4], sizes = [2, 1], strides = [1, 1]} : vector<2x8xi32> to vector<2x1xi32>
    %43 = vector.broadcast %42 : vector<2x1xi32> to vector<2x64xi32>
    %44 = arith.cmpi eq, %43, %16 : vector<2x64xi32>
    %45 = arith.extui %44 : vector<2x64xi1> to vector<2x64xi32>
    %46 = arith.sitofp %45 : vector<2x64xi32> to vector<2x64xf32>
    %47 = arith.addf %41, %46 : vector<2x64xf32>
    %48 = vector.extract_strided_slice %15 {offsets = [0, 5], sizes = [2, 1], strides = [1, 1]} : vector<2x8xi32> to vector<2x1xi32>
    %49 = vector.broadcast %48 : vector<2x1xi32> to vector<2x64xi32>
    %50 = arith.cmpi eq, %49, %16 : vector<2x64xi32>
    %51 = arith.extui %50 : vector<2x64xi1> to vector<2x64xi32>
    %52 = arith.sitofp %51 : vector<2x64xi32> to vector<2x64xf32>
    %53 = arith.addf %47, %52 : vector<2x64xf32>
    %54 = vector.extract_strided_slice %15 {offsets = [0, 6], sizes = [2, 1], strides = [1, 1]} : vector<2x8xi32> to vector<2x1xi32>
    %55 = vector.broadcast %54 : vector<2x1xi32> to vector<2x64xi32>
    %56 = arith.cmpi eq, %55, %16 : vector<2x64xi32>
    %57 = arith.extui %56 : vector<2x64xi1> to vector<2x64xi32>
    %58 = arith.sitofp %57 : vector<2x64xi32> to vector<2x64xf32>
    %59 = arith.addf %53, %58 : vector<2x64xf32>
    %60 = vector.extract_strided_slice %15 {offsets = [0, 7], sizes = [2, 1], strides = [1, 1]} : vector<2x8xi32> to vector<2x1xi32>
    %61 = vector.broadcast %60 : vector<2x1xi32> to vector<2x64xi32>
    %62 = arith.cmpi eq, %61, %16 : vector<2x64xi32>
    %63 = arith.extui %62 : vector<2x64xi1> to vector<2x64xi32>
    %64 = arith.sitofp %63 : vector<2x64xi32> to vector<2x64xf32>
    %65 = arith.addf %59, %64 : vector<2x64xf32>
    %cst_12 = arith.constant 1.250000e-01 : f32
    %66 = vector.broadcast %cst_12 : f32 to vector<2x64xf32>
    %67 = arith.mulf %65, %66 : vector<2x64xf32>
    %68 = arith.truncf %67 : vector<2x64xf32> to vector<2x64xbf16>
    %c0_13 = arith.constant 0 : index
    %c0_14 = arith.constant 0 : index
    %69 = vector.load %arg4[%c0_13, %c0_14] : memref<64x64xbf16, #tpu.memory_space<vmem>>, vector<64x64xbf16>
    %cst_15 = arith.constant dense<0.000000e+00> : vector<2x64xf32>
    %70 = tpu.matmul %68, %69, %cst_15 {dimension_numbers = #tpu.dot_dimension_numbers<[1], [0], [0], [1], [0, 0, 1, 1], [], []>} : vector<2x64xbf16>, vector<64x64xbf16>, vector<2x64xf32> -> vector<2x64xf32>
    %71 = arith.truncf %70 : vector<2x64xf32> to vector<2x64xbf16>
    %c0_16 = arith.constant 0 : index
    %c0_17 = arith.constant 0 : index
    %72 = vector.load %arg5[%c0_16, %c0_17] : memref<64x128xbf16, #tpu.memory_space<vmem>>, vector<64x128xbf16>
    %cst_18 = arith.constant dense<0.000000e+00> : vector<2x128xf32>
    %73 = tpu.matmul %71, %72, %cst_18 {dimension_numbers = #tpu.dot_dimension_numbers<[1], [0], [0], [1], [0, 0, 1, 1], [], []>} : vector<2x64xbf16>, vector<64x128xbf16>, vector<2x128xf32> -> vector<2x128xf32>
    %c0_19 = arith.constant 0 : index
    %c0_20 = arith.constant 0 : index
    %74 = vector.load %arg6[%c0_19, %c0_20] : memref<1x128xf32, #tpu.memory_space<vmem>>, vector<1x128xf32>
    %75 = vector.broadcast %74 : vector<1x128xf32> to vector<2x128xf32>
    %76 = arith.addf %73, %75 : vector<2x128xf32>
    %77 = arith.mulf %76, %76 : vector<2x128xf32>
    %cst_21 = arith.constant dense<0.000000e+00> : vector<2xf32>
    %78 = vector.multi_reduction <add>, %77, %cst_21 [1] : vector<2x128xf32> to vector<2xf32>
    %79 = vector.shape_cast %78 : vector<2xf32> to vector<2x1xf32>
    %cst_22 = arith.constant 9.99999996E-13 : f32
    %80 = vector.broadcast %cst_22 : f32 to vector<2x1xf32>
    %81 = arith.addf %79, %80 : vector<2x1xf32>
    %82 = math.rsqrt %81 : vector<2x1xf32>
    %83 = vector.broadcast %82 : vector<2x1xf32> to vector<2x128xf32>
    %84 = arith.mulf %76, %83 : vector<2x128xf32>
    %c0_23 = arith.constant 0 : index
    %c0_24 = arith.constant 0 : index
    %85 = vector.load %arg12[%c0_23, %c0_24] : memref<2x128xf32, #tpu.memory_space<vmem>>, vector<2x128xf32>
    tpu.vector_store %arg12[%c0_23, %c0_24], %84 {strides = array<i32>} : memref<2x128xf32, #tpu.memory_space<vmem>>, vector<2x128xf32>,
    %86 = arith.truncf %84 : vector<2x128xf32> to vector<2x128xbf16>
    %c0_25 = arith.constant 0 : index
    %c0_26 = arith.constant 0 : index
    %87 = vector.load %arg7[%c0_25, %c0_26] : memref<128x128xbf16, #tpu.memory_space<vmem>>, vector<128x128xbf16>
    %cst_27 = arith.constant dense<0.000000e+00> : vector<2x128xf32>
    %88 = tpu.matmul %86, %87, %cst_27 {dimension_numbers = #tpu.dot_dimension_numbers<[1], [0], [0], [1], [0, 0, 1, 1], [], []>} : vector<2x128xbf16>, vector<128x128xbf16>, vector<2x128xf32> -> vector<2x128xf32>
    %c0_28 = arith.constant 0 : index
    %c0_29 = arith.constant 0 : index
    %89 = vector.load %arg8[%c0_28, %c0_29] : memref<1x128xf32, #tpu.memory_space<vmem>>, vector<1x128xf32>
    %90 = vector.broadcast %89 : vector<1x128xf32> to vector<2x128xf32>
    %91 = arith.addf %88, %90 : vector<2x128xf32>
    %cst_30 = arith.constant 0.000000e+00 : f32
    %92 = vector.broadcast %cst_30 : f32 to vector<2x128xf32>
    %93 = arith.maximumf %91, %92 : vector<2x128xf32>
    %94 = arith.truncf %93 : vector<2x128xf32> to vector<2x128xbf16>
    %c0_31 = arith.constant 0 : index
    %c0_32 = arith.constant 0 : index
    %95 = vector.load %arg9[%c0_31, %c0_32] : memref<128x128xbf16, #tpu.memory_space<vmem>>, vector<128x128xbf16>
    %cst_33 = arith.constant dense<0.000000e+00> : vector<2x128xf32>
    %96 = tpu.matmul %94, %95, %cst_33 {dimension_numbers = #tpu.dot_dimension_numbers<[1], [0], [0], [1], [0, 0, 1, 1], [], []>} : vector<2x128xbf16>, vector<128x128xbf16>, vector<2x128xf32> -> vector<2x128xf32>
    %c0_34 = arith.constant 0 : index
    %c0_35 = arith.constant 0 : index
    %97 = vector.load %arg10[%c0_34, %c0_35] : memref<1x128xf32, #tpu.memory_space<vmem>>, vector<1x128xf32>
    %98 = vector.broadcast %97 : vector<1x128xf32> to vector<2x128xf32>
    %99 = arith.addf %96, %98 : vector<2x128xf32>
    %c0_36 = arith.constant 0 : index
    %c0_37 = arith.constant 0 : index
    %100 = vector.load %arg13[%c0_36, %c0_37] : memref<2x128xf32, #tpu.memory_space<vmem>>, vector<2x128xf32>
    tpu.vector_store %arg13[%c0_36, %c0_37], %99 {strides = array<i32>} : memref<2x128xf32, #tpu.memory_space<vmem>>, vector<2x128xf32>,
    return
  }
}

</mosaic_0001>

<llo_original>
// kernel: tpu_custom_call.1
$region0: #{tpu_custom_call.1}
  #allocation0 [shape = 'u32[]', space=smem, size = 0x4, offset = 0x4, fixed_abs, tag = 'smem constant byte address 0x4 - core index']
  #allocation1 [shape = 'u32[144,128]{1,0:T(1,128)}', space=vmem, size = 0x12000, scoped, tag = 'internal scratch']
  %s0 = inlined_call_operand.hbm [shape: bf16[2,1024], index: 0, kind: input, shape index: {}]
  %s1 = inlined_call_operand.hbm [shape: bf16[1024,128], index: 1, kind: input, shape index: {}]
  %s2 = inlined_call_operand.vmem [shape: f32[1,128], index: 2, kind: input, shape index: {}]
  %s3 = inlined_call_operand.vmem [shape: s32[2,8], index: 3, kind: input, shape index: {}]
  %s4 = inlined_call_operand.hbm [shape: bf16[64,64], index: 4, kind: input, shape index: {}]
  %s5 = inlined_call_operand.hbm [shape: bf16[64,128], index: 5, kind: input, shape index: {}]
  %s6 = inlined_call_operand.vmem [shape: f32[1,128], index: 6, kind: input, shape index: {}]
  %s7 = inlined_call_operand.hbm [shape: bf16[128,128], index: 7, kind: input, shape index: {}]
  %s8 = inlined_call_operand.vmem [shape: f32[1,128], index: 8, kind: input, shape index: {}]
  %s9 = inlined_call_operand.hbm [shape: bf16[128,128], index: 9, kind: input, shape index: {}]
  %s10 = inlined_call_operand.vmem [shape: f32[1,128], index: 10, kind: input, shape index: {}]
  %s11 = inlined_call_operand.hbm [shape: f32[2,128], index: 11, kind: output, shape index: {0}]
  %s12 = inlined_call_operand.hbm [shape: f32[2,128], index: 12, kind: output, shape index: {1}]
  %s13 = inlined_call_operand.hbm [shape: f32[2,128], index: 13, kind: output, shape index: {2}]
  %14 = xla_tuple %s11, %s12, %s13
  %s15 = sld [smem:[#allocation0]]
  $region94: #{tpu_custom_call.1} parent=0
    _
  %s17 = ssub.s32 1, %s15
  %s18 = scalar_select 0, %s17, %s15
  $region1: #{tpu_custom_call.1} parent=0
    #allocation2 [shape = 'u8[4096]{0}', space=vmem, size = 0x1000, scoped, tag = 'input window, operand 0, single buffered']
    #allocation3 [shape = 's32[1]{0}', space=sflag, size = 0x4, scoped, tag = 'scoped memory for tpu_custom_call.1']
    #allocation4 [shape = 's32[1]{0}', space=sflag, size = 0x4, scoped, tag = 'scoped memory for tpu_custom_call.1']
    #allocation5 [shape = 'u8[262144]{0}', space=vmem, size = 0x40000, scoped, tag = 'input window, operand 1, single buffered']
    #allocation6 [shape = 's32[1]{0}', space=sflag, size = 0x4, scoped, tag = 'scoped memory for tpu_custom_call.1']
    #allocation7 [shape = 'u8[16384]{0}', space=vmem, size = 0x4000, scoped, tag = 'input window, operand 4, single buffered']
    #allocation8 [shape = 'u8[16384]{0}', space=vmem, size = 0x4000, scoped, tag = 'input window, operand 5, single buffered']
    #allocation9 [shape = 's32[1]{0}', space=sflag, size = 0x4, scoped, tag = 'scoped memory for tpu_custom_call.1']
    #allocation10 [shape = 'u8[32768]{0}', space=vmem, size = 0x8000, scoped, tag = 'input window, operand 7, single buffered']
    #allocation11 [shape = 'u8[32768]{0}', space=vmem, size = 0x8000, scoped, tag = 'input window, operand 9, single buffered']
    #allocation12 [shape = 's32[1]{0}', space=sflag, size = 0x4, scoped, tag = 'scoped memory for tpu_custom_call.1']
    #allocation13 [shape = 'u8[1024]{0}', space=vmem, size = 0x400, scoped, tag = 'output window, operand 0, single buffered']
    #allocation14 [shape = 'u8[1024]{0}', space=vmem, size = 0x400, scoped, tag = 'output window, operand 1, single buffered']
    #allocation15 [shape = 's32[1]{0}', space=sflag, size = 0x4, scoped, tag = 'scoped memory for tpu_custom_call.1']
    #allocation16 [shape = 'u8[1024]{0}', space=vmem, size = 0x400, scoped, tag = 'output window, operand 2, single buffered']
    %19 = vsyncpa [#allocation3], 0
    %20 = vsyncpa [#allocation6], 0
    %21 = vsyncpa [#allocation9], 0
    %22 = vsyncpa [#allocation12], 0
    %23 = vsyncpa [#allocation4], 0
    %24 = vsyncpa [#allocation15], 0
    // Predicated region
    $region2: #{tpu_custom_call.1} parent=1 // pred_check
      _
    $region3: #{tpu_custom_call.1} parent=1 // pred_check_branch
      %26 = sbr.rel (0) target = $region5
    $region4: #{tpu_custom_call.1} parent=1 // pred_region
      %s28 = ssub.s32 128, 128
      %29 = vsyncadd [#allocation3], %s28
      %s31 = sshll.u32 [#allocation2], 4
      %s32 = int_to_ptr.vmem [resolvable:$true] %s31
      %34 = dma.hbm_to_vmem [thread:$0]  %s0, 128, %s32, [#allocation3]
    $region5: #{tpu_custom_call.1} parent=1 // pred_fallthru
      _
    // Predicated region
    $region6: #{tpu_custom_call.1} parent=1 // pred_check
      _
    $region7: #{tpu_custom_call.1} parent=1 // pred_check_branch
      %36 = sbr.rel (0) target = $region9
    $region8: #{tpu_custom_call.1} parent=1 // pred_region
      %s38 = ssub.s32 8192, 8192
      %39 = vsyncadd [#allocation6], %s38
      %s40 = sshll.u32 [#allocation5], 4
      %s41 = int_to_ptr.vmem [resolvable:$true] %s40
      %46 = dma.hbm_to_vmem [thread:$0]  %s1, 8192, %s41, [#allocation6], 64, 64, 4
    $region9: #{tpu_custom_call.1} parent=1 // pred_fallthru
      _
    // Predicated region
    $region10: #{tpu_custom_call.1} parent=1 // pred_check
      _
    $region11: #{tpu_custom_call.1} parent=1 // pred_check_branch
      %48 = sbr.rel (0) target = $region13
    $region12: #{tpu_custom_call.1} parent=1 // pred_region
      _
    $region13: #{tpu_custom_call.1} parent=1 // pred_fallthru
      _
    // Predicated region
    $region14: #{tpu_custom_call.1} parent=1 // pred_check
      _
    $region15: #{tpu_custom_call.1} parent=1 // pred_check_branch
      %50 = sbr.rel (0) target = $region17
    $region16: #{tpu_custom_call.1} parent=1 // pred_region
      _
    $region17: #{tpu_custom_call.1} parent=1 // pred_fallthru
      _
    // Predicated region
    $region18: #{tpu_custom_call.1} parent=1 // pred_check
      _
    $region19: #{tpu_custom_call.1} parent=1 // pred_check_branch
      %52 = sbr.rel (0) target = $region21
    $region20: #{tpu_custom_call.1} parent=1 // pred_region
      %s54 = ssub.s32 512, 512
      %55 = vsyncadd [#allocation6], %s54
      %s56 = sshll.u32 [#allocation7], 4
      %s57 = int_to_ptr.vmem [resolvable:$true] %s56
      %62 = dma.hbm_to_vmem [thread:$0]  %s4, 512, %s57, [#allocation6], 64, 64, 4
    $region21: #{tpu_custom_call.1} parent=1 // pred_fallthru
      _
    // Predicated region
    $region22: #{tpu_custom_call.1} parent=1 // pred_check
      _
    $region23: #{tpu_custom_call.1} parent=1 // pred_check_branch
      %64 = sbr.rel (0) target = $region25
    $region24: #{tpu_custom_call.1} parent=1 // pred_region
      %s66 = ssub.s32 512, 512
      %67 = vsyncadd [#allocation9], %s66
      %s68 = sshll.u32 [#allocation8], 4
      %s69 = int_to_ptr.vmem [resolvable:$true] %s68
      %74 = dma.hbm_to_vmem [thread:$0]  %s5, 512, %s69, [#allocation9], 64, 64, 4
    $region25: #{tpu_custom_call.1} parent=1 // pred_fallthru
      _
    // Predicated region
    $region26: #{tpu_custom_call.1} parent=1 // pred_check
      _
    $region27: #{tpu_custom_call.1} parent=1 // pred_check_branch
      %76 = sbr.rel (0) target = $region29
    $region28: #{tpu_custom_call.1} parent=1 // pred_region
      _
    $region29: #{tpu_custom_call.1} parent=1 // pred_fallthru
      _
    // Predicated region
    $region30: #{tpu_custom_call.1} parent=1 // pred_check
      _
    $region31: #{tpu_custom_call.1} parent=1 // pred_check_branch
      %78 = sbr.rel (0) target = $region33
    $region32: #{tpu_custom_call.1} parent=1 // pred_region
      %s80 = ssub.s32 1024, 1024
      %81 = vsyncadd [#allocation9], %s80
      %s82 = sshll.u32 [#allocation10], 4
      %s83 = int_to_ptr.vmem [resolvable:$true] %s82
      %88 = dma.hbm_to_vmem [thread:$0]  %s7, 1024, %s83, [#allocation9], 64, 64, 4
    $region33: #{tpu_custom_call.1} parent=1 // pred_fallthru
      _
    // Predicated region
    $region34: #{tpu_custom_call.1} parent=1 // pred_check
      _
    $region35: #{tpu_custom_call.1} parent=1 // pred_check_branch
      %90 = sbr.rel (0) target = $region37
    $region36: #{tpu_custom_call.1} parent=1 // pred_region
      _
    $region37: #{tpu_custom_call.1} parent=1 // pred_fallthru
      _
    // Predicated region
    $region38: #{tpu_custom_call.1} parent=1 // pred_check
      _
    $region39: #{tpu_custom_call.1} parent=1 // pred_check_branch
      %92 = sbr.rel (0) target = $region41
    $region40: #{tpu_custom_call.1} parent=1 // pred_region
      %s94 = ssub.s32 1024, 1024
      %95 = vsyncadd [#allocation12], %s94
      %s96 = sshll.u32 [#allocation11], 4
      %s97 = int_to_ptr.vmem [resolvable:$true] %s96
      %102 = dma.hbm_to_vmem [thread:$0]  %s9, 1024, %s97, [#allocation12], 64, 64, 4
    $region41: #{tpu_custom_call.1} parent=1 // pred_fallthru
      _
    // Predicated region
    $region42: #{tpu_custom_call.1} parent=1 // pred_check
      _
    $region43: #{tpu_custom_call.1} parent=1 // pred_check_branch
      %104 = sbr.rel (0) target = $region45
    $region44: #{tpu_custom_call.1} parent=1 // pred_region
      _
    $region45: #{tpu_custom_call.1} parent=1 // pred_fallthru
      _
    // Predicated region
    $region46: #{tpu_custom_call.1} parent=1 // pred_check
      _
    $region47: #{tpu_custom_call.1} parent=1 // pred_check_branch
      %106 = sbr.rel (0) target = $region49
    $region48: #{tpu_custom_call.1} parent=1 // pred_region
      %107 = dma.done [#allocation3], 128
    $region49: #{tpu_custom_call.1} parent=1 // pred_fallthru
      _
    // Predicated region
    $region50: #{tpu_custom_call.1} parent=1 // pred_check
      _
    $region51: #{tpu_custom_call.1} parent=1 // pred_check_branch
      %109 = sbr.rel (0) target = $region53
    $region52: #{tpu_custom_call.1} parent=1 // pred_region
      %110 = dma.done [#allocation6], 8192
    $region53: #{tpu_custom_call.1} parent=1 // pred_fallthru
      _
    // Predicated region
    $region54: #{tpu_custom_call.1} parent=1 // pred_check
      _
    $region55: #{tpu_custom_call.1} parent=1 // pred_check_branch
      %112 = sbr.rel (0) target = $region57
    $region56: #{tpu_custom_call.1} parent=1 // pred_region
      %113 = dma.done [#allocation6], 512
    $region57: #{tpu_custom_call.1} parent=1 // pred_fallthru
      _
    // Predicated region
    $region58: #{tpu_custom_call.1} parent=1 // pred_check
      _
    $region59: #{tpu_custom_call.1} parent=1 // pred_check_branch
      %115 = sbr.rel (0) target = $region61
    $region60: #{tpu_custom_call.1} parent=1 // pred_region
      %116 = dma.done [#allocation9], 512
    $region61: #{tpu_custom_call.1} parent=1 // pred_fallthru
      _
    // Predicated region
    $region62: #{tpu_custom_call.1} parent=1 // pred_check
      _
    $region63: #{tpu_custom_call.1} parent=1 // pred_check_branch
      %118 = sbr.rel (0) target = $region65
    $region64: #{tpu_custom_call.1} parent=1 // pred_region
      %119 = dma.done [#allocation9], 1024
    $region65: #{tpu_custom_call.1} parent=1 // pred_fallthru
      _
    // Predicated region
    $region66: #{tpu_custom_call.1} parent=1 // pred_check
      _
    $region67: #{tpu_custom_call.1} parent=1 // pred_check_branch
      %121 = sbr.rel (0) target = $region69
    $region68: #{tpu_custom_call.1} parent=1 // pred_region
      %122 = dma.done [#allocation12], 1024
    $region69: #{tpu_custom_call.1} parent=1 // pred_fallthru
      _
    %v124 = vld [vmem:[#allocation2] sm:$0xff]
    %v125 = vld [vmem:[#allocation5] sm:$0xf]
    %v126 = vld [vmem:[#allocation5 + $0x4] sm:$0xf]
    %v127 = vld [vmem:[#allocation5 + $0x8] sm:$0xf]
    %v128 = vld [vmem:[#allocation5 + $0xc] sm:$0xf]
    %v129 = vld [vmem:[#allocation5 + $0x10] sm:$0xf]
    %v130 = vld [vmem:[#allocation5 + $0x14] sm:$0xf]
    %v131 = vld [vmem:[#allocation5 + $0x18] sm:$0xf]
    %v132 = vld [vmem:[#allocation5 + $0x1c] sm:$0xf]
    %v133 = vld [vmem:[#allocation5 + $0x20] sm:$0xf]
    %v134 = vld [vmem:[#allocation5 + $0x24] sm:$0xf]
    %v135 = vld [vmem:[#allocation5 + $0x28] sm:$0xf]
    %v136 = vld [vmem:[#allocation5 + $0x2c] sm:$0xf]
    %v137 = vld [vmem:[#allocation5 + $0x30] sm:$0xf]
    %v138 = vld [vmem:[#allocation5 + $0x34] sm:$0xf]
    %v139 = vld [vmem:[#allocation5 + $0x38] sm:$0xf]
    %v140 = vld [vmem:[#allocation5 + $0x3c] sm:$0xf]
    %v141 = vld [vmem:[#allocation5 + $0x40] sm:$0xf]
    %v142 = vld [vmem:[#allocation5 + $0x44] sm:$0xf]
    %v143 = vld [vmem:[#allocation5 + $0x48] sm:$0xf]
    %v144 = vld [vmem:[#allocation5 + $0x4c] sm:$0xf]
    %v145 = vld [vmem:[#allocation5 + $0x50] sm:$0xf]
    %v146 = vld [vmem:[#allocation5 + $0x54] sm:$0xf]
    %v147 = vld [vmem:[#allocation5 + $0x58] sm:$0xf]
    %v148 = vld [vmem:[#allocation5 + $0x5c] sm:$0xf]
    %v149 = vld [vmem:[#allocation5 + $0x60] sm:$0xf]
    %v150 = vld [vmem:[#allocation5 + $0x64] sm:$0xf]
    %v151 = vld [vmem:[#allocation5 + $0x68] sm:$0xf]
    %v152 = vld [vmem:[#allocation5 + $0x6c] sm:$0xf]
    %v153 = vld [vmem:[#allocation5 + $0x70] sm:$0xf]
    %v154 = vld [vmem:[#allocation5 + $0x74] sm:$0xf]
    %v155 = vld [vmem:[#allocation5 + $0x78] sm:$0xf]
    %v156 = vld [vmem:[#allocation5 + $0x7c] sm:$0xf]
    %v157 = vld [vmem:[#allocation5 + $0x80] sm:$0xf]
    %v158 = vld [vmem:[#allocation5 + $0x84] sm:$0xf]
    %v159 = vld [vmem:[#allocation5 + $0x88] sm:$0xf]
    %v160 = vld [vmem:[#allocation5 + $0x8c] sm:$0xf]
    %v161 = vld [vmem:[#allocation5 + $0x90] sm:$0xf]
    %v162 = vld [vmem:[#allocation5 + $0x94] sm:$0xf]
    %v163 = vld [vmem:[#allocation5 + $0x98] sm:$0xf]
    %v164 = vld [vmem:[#allocation5 + $0x9c] sm:$0xf]
    %v165 = vld [vmem:[#allocation5 + $0xa0] sm:$0xf]
    %v166 = vld [vmem:[#allocation5 + $0xa4] sm:$0xf]
    %v167 = vld [vmem:[#allocation5 + $0xa8] sm:$0xf]
    %v168 = vld [vmem:[#allocation5 + $0xac] sm:$0xf]
    %v169 = vld [vmem:[#allocation5 + $0xb0] sm:$0xf]
    %v170 = vld [vmem:[#allocation5 + $0xb4] sm:$0xf]
    %v171 = vld [vmem:[#allocation5 + $0xb8] sm:$0xf]
    %v172 = vld [vmem:[#allocation5 + $0xbc] sm:$0xf]
    %v173 = vld [vmem:[#allocation5 + $0xc0] sm:$0xf]
    %v174 = vld [vmem:[#allocation5 + $0xc4] sm:$0xf]
    %v175 = vld [vmem:[#allocation5 + $0xc8] sm:$0xf]
    %v176 = vld [vmem:[#allocation5 + $0xcc] sm:$0xf]
    %v177 = vld [vmem:[#allocation5 + $0xd0] sm:$0xf]
    %v178 = vld [vmem:[#allocation5 + $0xd4] sm:$0xf]
    %v179 = vld [vmem:[#allocation5 + $0xd8] sm:$0xf]
    %v180 = vld [vmem:[#allocation5 + $0xdc] sm:$0xf]
    %v181 = vld [vmem:[#allocation5 + $0xe0] sm:$0xf]
    %v182 = vld [vmem:[#allocation5 + $0xe4] sm:$0xf]
    %v183 = vld [vmem:[#allocation5 + $0xe8] sm:$0xf]
    %v184 = vld [vmem:[#allocation5 + $0xec] sm:$0xf]
    %v185 = vld [vmem:[#allocation5 + $0xf0] sm:$0xf]
    %v186 = vld [vmem:[#allocation5 + $0xf4] sm:$0xf]
    %v187 = vld [vmem:[#allocation5 + $0xf8] sm:$0xf]
    %v188 = vld [vmem:[#allocation5 + $0xfc] sm:$0xf]
    %v189 = vld [vmem:[#allocation5 + $0x100] sm:$0xf]
    %v190 = vld [vmem:[#allocation5 + $0x104] sm:$0xf]
    %v191 = vld [vmem:[#allocation5 + $0x108] sm:$0xf]
    %v192 = vld [vmem:[#allocation5 + $0x10c] sm:$0xf]
    %v193 = vld [vmem:[#allocation5 + $0x110] sm:$0xf]
    %v194 = vld [vmem:[#allocation5 + $0x114] sm:$0xf]
    %v195 = vld [vmem:[#allocation5 + $0x118] sm:$0xf]
    %v196 = vld [vmem:[#allocation5 + $0x11c] sm:$0xf]
    %v197 = vld [vmem:[#allocation5 + $0x120] sm:$0xf]
    %v198 = vld [vmem:[#allocation5 + $0x124] sm:$0xf]
    %v199 = vld [vmem:[#allocation5 + $0x128] sm:$0xf]
    %v200 = vld [vmem:[#allocation5 + $0x12c] sm:$0xf]
    %v201 = vld [vmem:[#allocation5 + $0x130] sm:$0xf]
    %v202 = vld [vmem:[#allocation5 + $0x134] sm:$0xf]
    %v203 = vld [vmem:[#allocation5 + $0x138] sm:$0xf]
    %v204 = vld [vmem:[#allocation5 + $0x13c] sm:$0xf]
    %v205 = vld [vmem:[#allocation5 + $0x140] sm:$0xf]
    %v206 = vld [vmem:[#allocation5 + $0x144] sm:$0xf]
    %v207 = vld [vmem:[#allocation5 + $0x148] sm:$0xf]
    %v208 = vld [vmem:[#allocation5 + $0x14c] sm:$0xf]
    %v209 = vld [vmem:[#allocation5 + $0x150] sm:$0xf]
    %v210 = vld [vmem:[#allocation5 + $0x154] sm:$0xf]
    %v211 = vld [vmem:[#allocation5 + $0x158] sm:$0xf]
    %v212 = vld [vmem:[#allocation5 + $0x15c] sm:$0xf]
    %v213 = vld [vmem:[#allocation5 + $0x160] sm:$0xf]
    %v214 = vld [vmem:[#allocation5 + $0x164] sm:$0xf]
    %v215 = vld [vmem:[#allocation5 + $0x168] sm:$0xf]
    %v216 = vld [vmem:[#allocation5 + $0x16c] sm:$0xf]
    %v217 = vld [vmem:[#allocation5 + $0x170] sm:$0xf]
    %v218 = vld [vmem:[#allocation5 + $0x174] sm:$0xf]
    %v219 = vld [vmem:[#allocation5 + $0x178] sm:$0xf]
    %v220 = vld [vmem:[#allocation5 + $0x17c] sm:$0xf]
    %v221 = vld [vmem:[#allocation5 + $0x180] sm:$0xf]
    %v222 = vld [vmem:[#allocation5 + $0x184] sm:$0xf]
    %v223 = vld [vmem:[#allocation5 + $0x188] sm:$0xf]
    %v224 = vld [vmem:[#allocation5 + $0x18c] sm:$0xf]
    %v225 = vld [vmem:[#allocation5 + $0x190] sm:$0xf]
    %v226 = vld [vmem:[#allocation5 + $0x194] sm:$0xf]
    %v227 = vld [vmem:[#allocation5 + $0x198] sm:$0xf]
    %v228 = vld [vmem:[#allocation5 + $0x19c] sm:$0xf]
    %v229 = vld [vmem:[#allocation5 + $0x1a0] sm:$0xf]
    %v230 = vld [vmem:[#allocation5 + $0x1a4] sm:$0xf]
    %v231 = vld [vmem:[#allocation5 + $0x1a8] sm:$0xf]
    %v232 = vld [vmem:[#allocation5 + $0x1ac] sm:$0xf]
    %v233 = vld [vmem:[#allocation5 + $0x1b0] sm:$0xf]
    %v234 = vld [vmem:[#allocation5 + $0x1b4] sm:$0xf]
    %v235 = vld [vmem:[#allocation5 + $0x1b8] sm:$0xf]
    %v236 = vld [vmem:[#allocation5 + $0x1bc] sm:$0xf]
    %v237 = vld [vmem:[#allocation5 + $0x1c0] sm:$0xf]
    %v238 = vld [vmem:[#allocation5 + $0x1c4] sm:$0xf]
    %v239 = vld [vmem:[#allocation5 + $0x1c8] sm:$0xf]
    %v240 = vld [vmem:[#allocation5 + $0x1cc] sm:$0xf]
    %v241 = vld [vmem:[#allocation5 + $0x1d0] sm:$0xf]
    %v242 = vld [vmem:[#allocation5 + $0x1d4] sm:$0xf]
    %v243 = vld [vmem:[#allocation5 + $0x1d8] sm:$0xf]
    %v244 = vld [vmem:[#allocation5 + $0x1dc] sm:$0xf]
    %v245 = vld [vmem:[#allocation5 + $0x1e0] sm:$0xf]
    %v246 = vld [vmem:[#allocation5 + $0x1e4] sm:$0xf]
    %v247 = vld [vmem:[#allocation5 + $0x1e8] sm:$0xf]
    %v248 = vld [vmem:[#allocation5 + $0x1ec] sm:$0xf]
    %v249 = vld [vmem:[#allocation5 + $0x1f0] sm:$0xf]
    %v250 = vld [vmem:[#allocation5 + $0x1f4] sm:$0xf]
    %v251 = vld [vmem:[#allocation5 + $0x1f8] sm:$0xf]
    %v252 = vld [vmem:[#allocation5 + $0x1fc] sm:$0xf]
    %v253 = vld [vmem:[%s2] sm:$0x1]
    %v255 = vlaneseq
    %v256 = vshrl.u32 %v255, 7
    %v257 = vsub.s32 0, %v256
    %v258 = vrot.slane %v253, %v257
    %v261 = vcombine.high %v124, %v124
    %v263 = vunpack.c.l.s4 1966171168
    %v264 = vunpack.c.0.s8 %v263
    %v265 = vlaneseq
    %v266 = vshrl.u32 %v265, 7
    %v267 = vsub.s32 %v264, %v266
    %v268 = vrot.slane %v124, %v267
    %v270 = vunpack.c.l.s4 1966171168
    %v271 = vunpack.c.0.s8 %v270
    %v272 = vlaneseq
    %v273 = vshrl.u32 %v272, 7
    %v274 = vsub.s32 %v271, %v273
    %v275 = vrot.slane %v261, %v274
    %v276 = vcombine.high %v268, %v268
    %v277 = vcombine.high %v275, %v275
    %v279 = vunpack.c.l.s4 1966171168
    %v280 = vunpack.c.0.s8 %v279
    %v281 = vlaneseq
    %v282 = vshrl.u32 %v281, 7
    %v283 = vsub.s32 %v280, %v282
    %v284 = vrot.slane %v268, %v283
    %v286 = vunpack.c.l.s4 1966171168
    %v287 = vunpack.c.0.s8 %v286
    %v288 = vlaneseq
    %v289 = vshrl.u32 %v288, 7
    %v290 = vsub.s32 %v287, %v289
    %v291 = vrot.slane %v275, %v290
    %v293 = vunpack.c.l.s4 1966171168
    %v294 = vunpack.c.0.s8 %v293
    %v295 = vlaneseq
    %v296 = vshrl.u32 %v295, 7
    %v297 = vsub.s32 %v294, %v296
    %v298 = vrot.slane %v276, %v297
    %v300 = vunpack.c.l.s4 1966171168
    %v301 = vunpack.c.0.s8 %v300
    %v302 = vlaneseq
    %v303 = vshrl.u32 %v302, 7
    %v304 = vsub.s32 %v301, %v303
    %v305 = vrot.slane %v277, %v304
    %v306 = vcombine.high %v284, %v284
    %v307 = vcombine.high %v291, %v291
    %v308 = vcombine.high %v298, %v298
    %v309 = vcombine.high %v305, %v305
    %v446 = vunpack.c.l.b16 %v125
    %v447 = vunpack.c.l.b16 %v126
    %v448 = vunpack.c.l.b16 %v127
    %v449 = vunpack.c.l.b16 %v128
    %v450 = vunpack.c.l.b16 %v129
    %v451 = vunpack.c.l.b16 %v130
    %v452 = vunpack.c.l.b16 %v131
    %v453 = vunpack.c.l.b16 %v132
    %v454 = vunpack.c.l.b16 %v133
    %v455 = vunpack.c.l.b16 %v134
    %v456 = vunpack.c.l.b16 %v135
    %v457 = vunpack.c.l.b16 %v136
    %v458 = vunpack.c.l.b16 %v137
    %v459 = vunpack.c.l.b16 %v138
    %v460 = vunpack.c.l.b16 %v139
    %v461 = vunpack.c.l.b16 %v140
    %v462 = vunpack.c.l.b16 %v141
    %v463 = vunpack.c.l.b16 %v142
    %v464 = vunpack.c.l.b16 %v143
    %v465 = vunpack.c.l.b16 %v144
    %v466 = vunpack.c.l.b16 %v145
    %v467 = vunpack.c.l.b16 %v146
    %v468 = vunpack.c.l.b16 %v147
    %v469 = vunpack.c.l.b16 %v148
    %v470 = vunpack.c.l.b16 %v149
    %v471 = vunpack.c.l.b16 %v150
    %v472 = vunpack.c.l.b16 %v151
    %v473 = vunpack.c.l.b16 %v152
    %v474 = vunpack.c.l.b16 %v153
    %v475 = vunpack.c.l.b16 %v154
    %v476 = vunpack.c.l.b16 %v155
    %v477 = vunpack.c.l.b16 %v156
    %v478 = vunpack.c.l.b16 %v157
    %v479 = vunpack.c.l.b16 %v158
    %v480 = vunpack.c.l.b16 %v159
    %v481 = vunpack.c.l.b16 %v160
    %v482 = vunpack.c.l.b16 %v161
    %v483 = vunpack.c.l.b16 %v162
    %v484 = vunpack.c.l.b16 %v163
    %v485 = vunpack.c.l.b16 %v164
    %v486 = vunpack.c.l.b16 %v165
    %v487 = vunpack.c.l.b16 %v166
    %v488 = vunpack.c.l.b16 %v167
    %v489 = vunpack.c.l.b16 %v168
    %v490 = vunpack.c.l.b16 %v169
    %v491 = vunpack.c.l.b16 %v170
    %v492 = vunpack.c.l.b16 %v171
    %v493 = vunpack.c.l.b16 %v172
    %v494 = vunpack.c.l.b16 %v173
    %v495 = vunpack.c.l.b16 %v174
    %v496 = vunpack.c.l.b16 %v175
    %v497 = vunpack.c.l.b16 %v176
    %v498 = vunpack.c.l.b16 %v177
    %v499 = vunpack.c.l.b16 %v178
    %v500 = vunpack.c.l.b16 %v179
    %v501 = vunpack.c.l.b16 %v180
    %v502 = vunpack.c.l.b16 %v181
    %v503 = vunpack.c.l.b16 %v182
    %v504 = vunpack.c.l.b16 %v183
    %v505 = vunpack.c.l.b16 %v184
    %v506 = vunpack.c.l.b16 %v185
    %v507 = vunpack.c.l.b16 %v186
    %v508 = vunpack.c.l.b16 %v187
    %v509 = vunpack.c.l.b16 %v188
    %v510 = vunpack.c.l.b16 %v189
    %v511 = vunpack.c.l.b16 %v190
    %v512 = vunpack.c.l.b16 %v191
    %v513 = vunpack.c.l.b16 %v192
    %v514 = vunpack.c.l.b16 %v193
    %v515 = vunpack.c.l.b16 %v194
    %v516 = vunpack.c.l.b16 %v195
    %v517 = vunpack.c.l.b16 %v196
    %v518 = vunpack.c.l.b16 %v197
    %v519 = vunpack.c.l.b16 %v198
    %v520 = vunpack.c.l.b16 %v199
    %v521 = vunpack.c.l.b16 %v200
    %v522 = vunpack.c.l.b16 %v201
    %v523 = vunpack.c.l.b16 %v202
    %v524 = vunpack.c.l.b16 %v203
    %v525 = vunpack.c.l.b16 %v204
    %v526 = vunpack.c.l.b16 %v205
    %v527 = vunpack.c.l.b16 %v206
    %v528 = vunpack.c.l.b16 %v207
    %v529 = vunpack.c.l.b16 %v208
    %v530 = vunpack.c.l.b16 %v209
    %v531 = vunpack.c.l.b16 %v210
    %v532 = vunpack.c.l.b16 %v211
    %v533 = vunpack.c.l.b16 %v212
    %v534 = vunpack.c.l.b16 %v213
    %v535 = vunpack.c.l.b16 %v214
    %v536 = vunpack.c.l.b16 %v215
    %v537 = vunpack.c.l.b16 %v216
    %v538 = vunpack.c.l.b16 %v217
    %v539 = vunpack.c.l.b16 %v218
    %v540 = vunpack.c.l.b16 %v219
    %v541 = vunpack.c.l.b16 %v220
    %v542 = vunpack.c.l.b16 %v221
    %v543 = vunpack.c.l.b16 %v222
    %v544 = vunpack.c.l.b16 %v223
    %v545 = vunpack.c.l.b16 %v224
    %v546 = vunpack.c.l.b16 %v225
    %v547 = vunpack.c.l.b16 %v226
    %v548 = vunpack.c.l.b16 %v227
    %v549 = vunpack.c.l.b16 %v228
    %v550 = vunpack.c.l.b16 %v229
    %v551 = vunpack.c.l.b16 %v230
    %v552 = vunpack.c.l.b16 %v231
    %v553 = vunpack.c.l.b16 %v232
    %v554 = vunpack.c.l.b16 %v233
    %v555 = vunpack.c.l.b16 %v234
    %v556 = vunpack.c.l.b16 %v235
    %v557 = vunpack.c.l.b16 %v236
    %v558 = vunpack.c.l.b16 %v237
    %v559 = vunpack.c.l.b16 %v238
    %v560 = vunpack.c.l.b16 %v239
    %v561 = vunpack.c.l.b16 %v240
    %v562 = vunpack.c.l.b16 %v241
    %v563 = vunpack.c.l.b16 %v242
    %v564 = vunpack.c.l.b16 %v243
    %v565 = vunpack.c.l.b16 %v244
    %v566 = vunpack.c.l.b16 %v245
    %v567 = vunpack.c.l.b16 %v246
    %v568 = vunpack.c.l.b16 %v247
    %v569 = vunpack.c.l.b16 %v248
    %v570 = vunpack.c.l.b16 %v249
    %v571 = vunpack.c.l.b16 %v250
    %v572 = vunpack.c.l.b16 %v251
    %v573 = vunpack.c.l.b16 %v252
    %v574 = vpack.c.b16 %v447, %v446
    %v575 = vpack.c.b16 %v449, %v448
    %v576 = vpack.c.b16 %v451, %v450
    %v577 = vpack.c.b16 %v453, %v452
    %v578 = vpack.c.b16 %v455, %v454
    %v579 = vpack.c.b16 %v457, %v456
    %v580 = vpack.c.b16 %v459, %v458
    %v581 = vpack.c.b16 %v461, %v460
    %v582 = vpack.c.b16 %v463, %v462
    %v583 = vpack.c.b16 %v465, %v464
    %v584 = vpack.c.b16 %v467, %v466
    %v585 = vpack.c.b16 %v469, %v468
    %v586 = vpack.c.b16 %v471, %v470
    %v587 = vpack.c.b16 %v473, %v472
    %v588 = vpack.c.b16 %v475, %v474
    %v589 = vpack.c.b16 %v477, %v476
    %v590 = vpack.c.b16 %v479, %v478
    %v591 = vpack.c.b16 %v481, %v480
    %v592 = vpack.c.b16 %v483, %v482
    %v593 = vpack.c.b16 %v485, %v484
    %v594 = vpack.c.b16 %v487, %v486
    %v595 = vpack.c.b16 %v489, %v488
    %v596 = vpack.c.b16 %v491, %v490
    %v597 = vpack.c.b16 %v493, %v492
    %v598 = vpack.c.b16 %v495, %v494
    %v599 = vpack.c.b16 %v497, %v496
    %v600 = vpack.c.b16 %v499, %v498
    %v601 = vpack.c.b16 %v501, %v500
    %v602 = vpack.c.b16 %v503, %v502
    %v603 = vpack.c.b16 %v505, %v504
    %v604 = vpack.c.b16 %v507, %v506
    %v605 = vpack.c.b16 %v509, %v508
    %v606 = vpack.c.b16 %v511, %v510
    %v607 = vpack.c.b16 %v513, %v512
    %v608 = vpack.c.b16 %v515, %v514
    %v609 = vpack.c.b16 %v517, %v516
    %v610 = vpack.c.b16 %v519, %v518
    %v611 = vpack.c.b16 %v521, %v520
    %v612 = vpack.c.b16 %v523, %v522
    %v613 = vpack.c.b16 %v525, %v524
    %v614 = vpack.c.b16 %v527, %v526
    %v615 = vpack.c.b16 %v529, %v528
    %v616 = vpack.c.b16 %v531, %v530
    %v617 = vpack.c.b16 %v533, %v532
    %v618 = vpack.c.b16 %v535, %v534
    %v619 = vpack.c.b16 %v537, %v536
    %v620 = vpack.c.b16 %v539, %v538
    %v621 = vpack.c.b16 %v541, %v540
    %v622 = vpack.c.b16 %v543, %v542
    %v623 = vpack.c.b16 %v545, %v544
    %v624 = vpack.c.b16 %v547, %v546
    %v625 = vpack.c.b16 %v549, %v548
    %v626 = vpack.c.b16 %v551, %v550
    %v627 = vpack.c.b16 %v553, %v552
    %v628 = vpack.c.b16 %v555, %v554
    %v629 = vpack.c.b16 %v557, %v556
    %v630 = vpack.c.b16 %v559, %v558
    %v631 = vpack.c.b16 %v561, %v560
    %v632 = vpack.c.b16 %v563, %v562
    %v633 = vpack.c.b16 %v565, %v564
    %v634 = vpack.c.b16 %v567, %v566
    %v635 = vpack.c.b16 %v569, %v568
    %v636 = vpack.c.b16 %v571, %v570
    %v637 = vpack.c.b16 %v573, %v572
    %702 = vmatprep.subr.bf16.mxu0 0
    %703 = vmatpush1.bf16.msra.mxu0 %v574
    %704 = vmatprep.subr.bf16.mxu0 0
    %705 = vmatpush1.bf16.msra.mxu0 %v575
    %706 = vmatprep.subr.bf16.mxu0 0
    %707 = vmatpush1.bf16.msra.mxu0 %v576
    %708 = vmatprep.subr.bf16.mxu0 0
    %709 = vmatpush1.bf16.msra.mxu0 %v577
    %710 = vmatprep.subr.bf16.mxu0 0
    %711 = vmatpush1.bf16.msra.mxu0 %v578
    %712 = vmatprep.subr.bf16.mxu0 0
    %713 = vmatpush1.bf16.msra.mxu0 %v579
    %714 = vmatprep.subr.bf16.mxu0 0
    %715 = vmatpush1.bf16.msra.mxu0 %v580
    %716 = vmatprep.subr.bf16.mxu0 0
    %717 = vmatpush1.bf16.msra.mxu0 %v581
    %718 = vmatprep.subr.bf16.mxu0 0
    %719 = vmatpush1.bf16.msra.mxu0 %v582
    %720 = vmatprep.subr.bf16.mxu0 0
    %721 = vmatpush1.bf16.msra.mxu0 %v583
    %722 = vmatprep.subr.bf16.mxu0 0
    %723 = vmatpush1.bf16.msra.mxu0 %v584
    %724 = vmatprep.subr.bf16.mxu0 0
    %725 = vmatpush1.bf16.msra.mxu0 %v585
    %726 = vmatprep.subr.bf16.mxu0 0
    %727 = vmatpush1.bf16.msra.mxu0 %v586
    %728 = vmatprep.subr.bf16.mxu0 0
    %729 = vmatpush1.bf16.msra.mxu0 %v587
    %730 = vmatprep.subr.bf16.mxu0 0
    %731 = vmatpush1.bf16.msra.mxu0 %v588
    %732 = vmatprep.subr.bf16.mxu0 0
    %733 = vmatpush1.bf16.msra.mxu0 %v589
    %734 = vmatprep.mubr.bf16.mxu0 %v298
    %735 = vmatmul.mubr.bf16.gmra.mrb[0].mxu0 %v284
    %v736 = vpop.f32.mrb[0].mxu0
    %v737 = vadd.f32 %v258, %v736
    %v738 = vpop.f32.mrb[0].mxu0
    %v739 = vpop.f32.mrb[0].mxu0
    %v740 = vpop.f32.mrb[0].mxu0
    %741 = vdwg.mxu0
    %742 = vmatprep.subr.bf16.mxu0 0
    %743 = vmatpush1.bf16.msra.mxu0 %v590
    %744 = vmatprep.subr.bf16.mxu0 0
    %745 = vmatpush1.bf16.msra.mxu0 %v591
    %746 = vmatprep.subr.bf16.mxu0 0
    %747 = vmatpush1.bf16.msra.mxu0 %v592
    %748 = vmatprep.subr.bf16.mxu0 0
    %749 = vmatpush1.bf16.msra.mxu0 %v593
    %750 = vmatprep.subr.bf16.mxu0 0
    %751 = vmatpush1.bf16.msra.mxu0 %v594
    %752 = vmatprep.subr.bf16.mxu0 0
    %753 = vmatpush1.bf16.msra.mxu0 %v595
    %754 = vmatprep.subr.bf16.mxu0 0
    %755 = vmatpush1.bf16.msra.mxu0 %v596
    %756 = vmatprep.subr.bf16.mxu0 0
    %757 = vmatpush1.bf16.msra.mxu0 %v597
    %758 = vmatprep.subr.bf16.mxu0 0
    %759 = vmatpush1.bf16.msra.mxu0 %v598
    %760 = vmatprep.subr.bf16.mxu0 0
    %761 = vmatpush1.bf16.msra.mxu0 %v599
    %762 = vmatprep.subr.bf16.mxu0 0
    %763 = vmatpush1.bf16.msra.mxu0 %v600
    %764 = vmatprep.subr.bf16.mxu0 0
    %765 = vmatpush1.bf16.msra.mxu0 %v601
    %766 = vmatprep.subr.bf16.mxu0 0
    %767 = vmatpush1.bf16.msra.mxu0 %v602
    %768 = vmatprep.subr.bf16.mxu0 0
    %769 = vmatpush1.bf16.msra.mxu0 %v603
    %770 = vmatprep.subr.bf16.mxu0 0
    %771 = vmatpush1.bf16.msra.mxu0 %v604
    %772 = vmatprep.subr.bf16.mxu0 0
    %773 = vmatpush1.bf16.msra.mxu0 %v605
    %774 = vmatprep.mubr.bf16.mxu0 %v308
    %775 = vmatmul.mubr.bf16.gmra.mrb[0].mxu0 %v306
    %v776 = vpop.f32.mrb[0].mxu0
    %v777 = vadd.f32 %v737, %v776
    %v778 = vpop.f32.mrb[0].mxu0
    %v779 = vpop.f32.mrb[0].mxu0
    %v780 = vpop.f32.mrb[0].mxu0
    %781 = vdwg.mxu0
    %782 = vmatprep.subr.bf16.mxu0 0
    %783 = vmatpush1.bf16.msra.mxu0 %v606
    %784 = vmatprep.subr.bf16.mxu0 0
    %785 = vmatpush1.bf16.msra.mxu0 %v607
    %786 = vmatprep.subr.bf16.mxu0 0
    %787 = vmatpush1.bf16.msra.mxu0 %v608
    %788 = vmatprep.subr.bf16.mxu0 0
    %789 = vmatpush1.bf16.msra.mxu0 %v609
    %790 = vmatprep.subr.bf16.mxu0 0
    %791 = vmatpush1.bf16.msra.mxu0 %v610
    %792 = vmatprep.subr.bf16.mxu0 0
    %793 = vmatpush1.bf16.msra.mxu0 %v611
    %794 = vmatprep.subr.bf16.mxu0 0
    %795 = vmatpush1.bf16.msra.mxu0 %v612
    %796 = vmatprep.subr.bf16.mxu0 0
    %797 = vmatpush1.bf16.msra.mxu0 %v613
    %798 = vmatprep.subr.bf16.mxu0 0
    %799 = vmatpush1.bf16.msra.mxu0 %v614
    %800 = vmatprep.subr.bf16.mxu0 0
    %801 = vmatpush1.bf16.msra.mxu0 %v615
    %802 = vmatprep.subr.bf16.mxu0 0
    %803 = vmatpush1.bf16.msra.mxu0 %v616
    %804 = vmatprep.subr.bf16.mxu0 0
    %805 = vmatpush1.bf16.msra.mxu0 %v617
    %806 = vmatprep.subr.bf16.mxu0 0
    %807 = vmatpush1.bf16.msra.mxu0 %v618
    %808 = vmatprep.subr.bf16.mxu0 0
    %809 = vmatpush1.bf16.msra.mxu0 %v619
    %810 = vmatprep.subr.bf16.mxu0 0
    %811 = vmatpush1.bf16.msra.mxu0 %v620
    %812 = vmatprep.subr.bf16.mxu0 0
    %813 = vmatpush1.bf16.msra.mxu0 %v621
    %814 = vmatprep.mubr.bf16.mxu0 %v305
    %815 = vmatmul.mubr.bf16.gmra.mrb[0].mxu0 %v291
    %v816 = vpop.f32.mrb[0].mxu0
    %v817 = vadd.f32 %v777, %v816
    %v818 = vpop.f32.mrb[0].mxu0
    %v819 = vpop.f32.mrb[0].mxu0
    %v820 = vpop.f32.mrb[0].mxu0
    %821 = vdwg.mxu0
    %822 = vmatprep.subr.bf16.mxu0 0
    %823 = vmatpush1.bf16.msra.mxu0 %v622
    %824 = vmatprep.subr.bf16.mxu0 0
    %825 = vmatpush1.bf16.msra.mxu0 %v623
    %826 = vmatprep.subr.bf16.mxu0 0
    %827 = vmatpush1.bf16.msra.mxu0 %v624
    %828 = vmatprep.subr.bf16.mxu0 0
    %829 = vmatpush1.bf16.msra.mxu0 %v625
    %830 = vmatprep.subr.bf16.mxu0 0
    %831 = vmatpush1.bf16.msra.mxu0 %v626
    %832 = vmatprep.subr.bf16.mxu0 0
    %833 = vmatpush1.bf16.msra.mxu0 %v627
    %834 = vmatprep.subr.bf16.mxu0 0
    %835 = vmatpush1.bf16.msra.mxu0 %v628
    %836 = vmatprep.subr.bf16.mxu0 0
    %837 = vmatpush1.bf16.msra.mxu0 %v629
    %838 = vmatprep.subr.bf16.mxu0 0
    %839 = vmatpush1.bf16.msra.mxu0 %v630
    %840 = vmatprep.subr.bf16.mxu0 0
    %841 = vmatpush1.bf16.msra.mxu0 %v631
    %842 = vmatprep.subr.bf16.mxu0 0
    %843 = vmatpush1.bf16.msra.mxu0 %v632
    %844 = vmatprep.subr.bf16.mxu0 0
    %845 = vmatpush1.bf16.msra.mxu0 %v633
    %846 = vmatprep.subr.bf16.mxu0 0
    %847 = vmatpush1.bf16.msra.mxu0 %v634
    %848 = vmatprep.subr.bf16.mxu0 0
    %849 = vmatpush1.bf16.msra.mxu0 %v635
    %850 = vmatprep.subr.bf16.mxu0 0
    %851 = vmatpush1.bf16.msra.mxu0 %v636
    %852 = vmatprep.subr.bf16.mxu0 0
    %853 = vmatpush1.bf16.msra.mxu0 %v637
    %854 = vmatprep.mubr.bf16.mxu0 %v309
    %855 = vmatmul.mubr.bf16.gmra.mrb[0].mxu0 %v307
    %v856 = vpop.f32.mrb[0].mxu0
    %v857 = vadd.f32 %v817, %v856
    %v858 = vpop.f32.mrb[0].mxu0
    %v859 = vpop.f32.mrb[0].mxu0
    %v860 = vpop.f32.mrb[0].mxu0
    %861 = vdwg.mxu0
    %v862 = vmul.f32 %v857, %v857
    %vm863 = vcmask 1041408
    %v864 = vsel %vm863, %v862, 0.0
    %865 = vadd.xlane.f32.xlu0 %v864
    %v866 = vpop.xlane.xlu0 %865
    %v867 = vadd.f32 %v866, 1e-12
    %v868 = vrsqrt.pop %v867
    %v869 = vmul.f32 %v857, %v868
    %870 = vst [vmem:[#allocation13] sm:$0x3] %v869
    %v871 = vld [vmem:[%s3] sm:$0x3]
    %v872 = vlaneseq
    %v873 = vand.u32 %v872, 127
    %874 = vset.pattern.permute.xlu0 0
    %875 = vperm.xlu0 %874, %v871
    %v876 = vpop.permute.xlu0 %875
    %vm877 = vcmp.eq.s32.totalorder %v876, %v873
    %v878 = vsel %vm877, 1, 0
    %v879 = vcvt.s32.f32 %v878
    %v880 = vadd.f32 %v879, 0.0
    %881 = vset.pattern.permute.xlu0 1
    %882 = vperm.xlu0 %881, %v871
    %v883 = vpop.permute.xlu0 %882
    %vm884 = vcmp.eq.s32.totalorder %v883, %v873
    %v885 = vsel %vm884, 1, 0
    %v886 = vcvt.s32.f32 %v885
    %v887 = vadd.f32 %v880, %v886
    %888 = vset.pattern.permute.xlu0 2
    %889 = vperm.xlu0 %888, %v871
    %v890 = vpop.permute.xlu0 %889
    %vm891 = vcmp.eq.s32.totalorder %v890, %v873
    %v892 = vsel %vm891, 1, 0
    %v893 = vcvt.s32.f32 %v892
    %v894 = vadd.f32 %v887, %v893
    %895 = vset.pattern.permute.xlu0 3
    %896 = vperm.xlu0 %895, %v871
    %v897 = vpop.permute.xlu0 %896
    %vm898 = vcmp.eq.s32.totalorder %v897, %v873
    %v899 = vsel %vm898, 1, 0
    %v900 = vcvt.s32.f32 %v899
    %v901 = vadd.f32 %v894, %v900
    %902 = vset.pattern.permute.xlu0 4
    %903 = vperm.xlu0 %902, %v871
    %v904 = vpop.permute.xlu0 %903
    %vm905 = vcmp.eq.s32.totalorder %v904, %v873
    %v906 = vsel %vm905, 1, 0
    %v907 = vcvt.s32.f32 %v906
    %v908 = vadd.f32 %v901, %v907
    %909 = vset.pattern.permute.xlu0 5
    %910 = vperm.xlu0 %909, %v871
    %v911 = vpop.permute.xlu0 %910
    %vm912 = vcmp.eq.s32.totalorder %v911, %v873
    %v913 = vsel %vm912, 1, 0
    %v914 = vcvt.s32.f32 %v913
    %v915 = vadd.f32 %v908, %v914
    %916 = vset.pattern.permute.xlu0 6
    %917 = vperm.xlu0 %916, %v871
    %v918 = vpop.permute.xlu0 %917
    %vm919 = vcmp.eq.s32.totalorder %v918, %v873
    %v920 = vsel %vm919, 1, 0
    %v921 = vcvt.s32.f32 %v920
    %v922 = vadd.f32 %v915, %v921
    %923 = vset.pattern.permute.xlu0 7
    %924 = vperm.xlu0 %923, %v871
    %v925 = vpop.permute.xlu0 %924
    %vm926 = vcmp.eq.s32.totalorder %v925, %v873
    %v927 = vsel %vm926, 1, 0
    %v928 = vcvt.s32.f32 %v927
    %v929 = vadd.f32 %v922, %v928
    %v930 = vmul.f32 %v929, 0.125
    %v931 = vpack.c.bf16 %v930, %v930
    %v932 = vld [vmem:[#allocation7] sm:$0xf]
    %v933 = vld [vmem:[#allocation7 + $0x4] sm:$0xf]
    %v934 = vld [vmem:[#allocation7 + $0x8] sm:$0xf]
    %v935 = vld [vmem:[#allocation7 + $0xc] sm:$0xf]
    %v936 = vld [vmem:[#allocation7 + $0x10] sm:$0xf]
    %v937 = vld [vmem:[#allocation7 + $0x14] sm:$0xf]
    %v938 = vld [vmem:[#allocation7 + $0x18] sm:$0xf]
    %v939 = vld [vmem:[#allocation7 + $0x1c] sm:$0xf]
    %v948 = vunpack.c.l.b16 %v932
    %v949 = vunpack.c.l.b16 %v933
    %v950 = vunpack.c.l.b16 %v934
    %v951 = vunpack.c.l.b16 %v935
    %v952 = vunpack.c.l.b16 %v936
    %v953 = vunpack.c.l.b16 %v937
    %v954 = vunpack.c.l.b16 %v938
    %v955 = vunpack.c.l.b16 %v939
    %v956 = vpack.c.b16 %v949, %v948
    %v957 = vpack.c.b16 %v951, %v950
    %v958 = vpack.c.b16 %v953, %v952
    %v959 = vpack.c.b16 %v955, %v954
    %vm964 = vcmask 523264
    %v966 = vsel %vm964, %v931, 0
    %968 = vmatprep.subr.bf16.mxu0 0
    %969 = vmatpush1.bf16.msra.mxu0 %v956
    %970 = vmatprep.subr.bf16.mxu0 0
    %971 = vmatpush1.bf16.msra.mxu0 %v957
    %972 = vmatprep.subr.bf16.mxu0 0
    %973 = vmatpush1.bf16.msra.mxu0 %v958
    %974 = vmatprep.subr.bf16.mxu0 0
    %975 = vmatpush1.bf16.msra.mxu0 %v959
    %976 = vmatprep.subr.bf16.mxu0 0
    %977 = vmatpush1.bf16.msra.mxu0 0
    %978 = vmatprep.subr.bf16.mxu0 0
    %979 = vmatpush1.bf16.msra.mxu0 0
    %980 = vmatprep.subr.bf16.mxu0 0
    %981 = vmatpush1.bf16.msra.mxu0 0
    %982 = vmatprep.subr.bf16.mxu0 0
    %983 = vmatpush1.bf16.msra.mxu0 0
    %984 = vmatprep.subr.bf16.mxu0 0
    %985 = vmatpush1.bf16.msra.mxu0 0
    %986 = vmatprep.subr.bf16.mxu0 0
    %987 = vmatpush1.bf16.msra.mxu0 0
    %988 = vmatprep.subr.bf16.mxu0 0
    %989 = vmatpush1.bf16.msra.mxu0 0
    %990 = vmatprep.subr.bf16.mxu0 0
    %991 = vmatpush1.bf16.msra.mxu0 0
    %992 = vmatprep.subr.bf16.mxu0 0
    %993 = vmatpush1.bf16.msra.mxu0 0
    %994 = vmatprep.subr.bf16.mxu0 0
    %995 = vmatpush1.bf16.msra.mxu0 0
    %996 = vmatprep.subr.bf16.mxu0 0
    %997 = vmatpush1.bf16.msra.mxu0 0
    %998 = vmatprep.subr.bf16.mxu0 0
    %999 = vmatpush1.bf16.msra.mxu0 0
    %1000 = vmatprep.mubr.bf16.mxu0 0
    %1001 = vmatmul.mubr.bf16.gmra.mrb[0].mxu0 %v966
    %v1002 = vpop.f32.mrb[0].mxu0
    %v1003 = vadd.f32 0.0, %v1002
    %v1004 = vpop.f32.mrb[0].mxu0
    %v1005 = vpop.f32.mrb[0].mxu0
    %v1006 = vpop.f32.mrb[0].mxu0
    %1007 = vdwg.mxu0
    %v1008 = vpack.c.bf16 %v1003, %v1003
    %v1009 = vld [vmem:[#allocation8] sm:$0xf]
    %v1010 = vld [vmem:[#allocation8 + $0x4] sm:$0xf]
    %v1011 = vld [vmem:[#allocation8 + $0x8] sm:$0xf]
    %v1012 = vld [vmem:[#allocation8 + $0xc] sm:$0xf]
    %v1013 = vld [vmem:[#allocation8 + $0x10] sm:$0xf]
    %v1014 = vld [vmem:[#allocation8 + $0x14] sm:$0xf]
    %v1015 = vld [vmem:[#allocation8 + $0x18] sm:$0xf]
    %v1016 = vld [vmem:[#allocation8 + $0x1c] sm:$0xf]
    %v1017 = vld [vmem:[%s6] sm:$0x1]
    %v1019 = vlaneseq
    %v1020 = vshrl.u32 %v1019, 7
    %v1021 = vsub.s32 0, %v1020
    %v1022 = vrot.slane %v1017, %v1021
    %v1032 = vunpack.c.l.b16 %v1009
    %v1033 = vunpack.c.l.b16 %v1010
    %v1034 = vunpack.c.l.b16 %v1011
    %v1035 = vunpack.c.l.b16 %v1012
    %v1036 = vunpack.c.l.b16 %v1013
    %v1037 = vunpack.c.l.b16 %v1014
    %v1038 = vunpack.c.l.b16 %v1015
    %v1039 = vunpack.c.l.b16 %v1016
    %v1040 = vpack.c.b16 %v1033, %v1032
    %v1041 = vpack.c.b16 %v1035, %v1034
    %v1042 = vpack.c.b16 %v1037, %v1036
    %v1043 = vpack.c.b16 %v1039, %v1038
    %v1049 = vsel %vm964, %v1008, 0
    %1051 = vmatprep.subr.bf16.mxu0 0
    %1052 = vmatpush1.bf16.msra.mxu0 %v1040
    %1053 = vmatprep.subr.bf16.mxu0 0
    %1054 = vmatpush1.bf16.msra.mxu0 %v1041
    %1055 = vmatprep.subr.bf16.mxu0 0
    %1056 = vmatpush1.bf16.msra.mxu0 %v1042
    %1057 = vmatprep.subr.bf16.mxu0 0
    %1058 = vmatpush1.bf16.msra.mxu0 %v1043
    %1059 = vmatprep.subr.bf16.mxu0 0
    %1060 = vmatpush1.bf16.msra.mxu0 0
    %1061 = vmatprep.subr.bf16.mxu0 0
    %1062 = vmatpush1.bf16.msra.mxu0 0
    %1063 = vmatprep.subr.bf16.mxu0 0
    %1064 = vmatpush1.bf16.msra.mxu0 0
    %1065 = vmatprep.subr.bf16.mxu0 0
    %1066 = vmatpush1.bf16.msra.mxu0 0
    %1067 = vmatprep.subr.bf16.mxu0 0
    %1068 = vmatpush1.bf16.msra.mxu0 0
    %1069 = vmatprep.subr.bf16.mxu0 0
    %1070 = vmatpush1.bf16.msra.mxu0 0
    %1071 = vmatprep.subr.bf16.mxu0 0
    %1072 = vmatpush1.bf16.msra.mxu0 0
    %1073 = vmatprep.subr.bf16.mxu0 0
    %1074 = vmatpush1.bf16.msra.mxu0 0
    %1075 = vmatprep.subr.bf16.mxu0 0
    %1076 = vmatpush1.bf16.msra.mxu0 0
    %1077 = vmatprep.subr.bf16.mxu0 0
    %1078 = vmatpush1.bf16.msra.mxu0 0
    %1079 = vmatprep.subr.bf16.mxu0 0
    %1080 = vmatpush1.bf16.msra.mxu0 0
    %1081 = vmatprep.subr.bf16.mxu0 0
    %1082 = vmatpush1.bf16.msra.mxu0 0
    %1083 = vmatprep.mubr.bf16.mxu0 0
    %1084 = vmatmul.mubr.bf16.gmra.mrb[0].mxu0 %v1049
    %v1085 = vpop.f32.mrb[0].mxu0
    %v1086 = vadd.f32 %v1022, %v1085
    %v1087 = vpop.f32.mrb[0].mxu0
    %v1088 = vpop.f32.mrb[0].mxu0
    %v1089 = vpop.f32.mrb[0].mxu0
    %1090 = vdwg.mxu0
    %v1091 = vmul.f32 %v1086, %v1086
    %v1092 = vsel %vm863, %v1091, 0.0
    %1093 = vadd.xlane.f32.xlu0 %v1092
    %v1094 = vpop.xlane.xlu0 %1093
    %v1095 = vadd.f32 %v1094, 1e-12
    %v1096 = vrsqrt.pop %v1095
    %v1097 = vmul.f32 %v1086, %v1096
    %1098 = vst [vmem:[#allocation14] sm:$0x3] %v1097
    %v1099 = vpack.c.bf16 %v1097, %v1097
    %v1100 = vld [vmem:[#allocation10] sm:$0xf]
    %v1101 = vld [vmem:[#allocation10 + $0x4] sm:$0xf]
    %v1102 = vld [vmem:[#allocation10 + $0x8] sm:$0xf]
    %v1103 = vld [vmem:[#allocation10 + $0xc] sm:$0xf]
    %v1104 = vld [vmem:[#allocation10 + $0x10] sm:$0xf]
    %v1105 = vld [vmem:[#allocation10 + $0x14] sm:$0xf]
    %v1106 = vld [vmem:[#allocation10 + $0x18] sm:$0xf]
    %v1107 = vld [vmem:[#allocation10 + $0x1c] sm:$0xf]
    %v1108 = vld [vmem:[#allocation10 + $0x20] sm:$0xf]
    %v1109 = vld [vmem:[#allocation10 + $0x24] sm:$0xf]
    %v1110 = vld [vmem:[#allocation10 + $0x28] sm:$0xf]
    %v1111 = vld [vmem:[#allocation10 + $0x2c] sm:$0xf]
    %v1112 = vld [vmem:[#allocation10 + $0x30] sm:$0xf]
    %v1113 = vld [vmem:[#allocation10 + $0x34] sm:$0xf]
    %v1114 = vld [vmem:[#allocation10 + $0x38] sm:$0xf]
    %v1115 = vld [vmem:[#allocation10 + $0x3c] sm:$0xf]
    %v1116 = vld [vmem:[%s8] sm:$0x1]
    %v1118 = vlaneseq
    %v1119 = vshrl.u32 %v1118, 7
    %v1120 = vsub.s32 0, %v1119
    %v1121 = vrot.slane %v1116, %v1120
    %v1139 = vunpack.c.l.b16 %v1100
    %v1140 = vunpack.c.l.b16 %v1101
    %v1141 = vunpack.c.l.b16 %v1102
    %v1142 = vunpack.c.l.b16 %v1103
    %v1143 = vunpack.c.l.b16 %v1104
    %v1144 = vunpack.c.l.b16 %v1105
    %v1145 = vunpack.c.l.b16 %v1106
    %v1146 = vunpack.c.l.b16 %v1107
    %v1147 = vunpack.c.l.b16 %v1108
    %v1148 = vunpack.c.l.b16 %v1109
    %v1149 = vunpack.c.l.b16 %v1110
    %v1150 = vunpack.c.l.b16 %v1111
    %v1151 = vunpack.c.l.b16 %v1112
    %v1152 = vunpack.c.l.b16 %v1113
    %v1153 = vunpack.c.l.b16 %v1114
    %v1154 = vunpack.c.l.b16 %v1115
    %v1155 = vpack.c.b16 %v1140, %v1139
    %v1156 = vpack.c.b16 %v1142, %v1141
    %v1157 = vpack.c.b16 %v1144, %v1143
    %v1158 = vpack.c.b16 %v1146, %v1145
    %v1159 = vpack.c.b16 %v1148, %v1147
    %v1160 = vpack.c.b16 %v1150, %v1149
    %v1161 = vpack.c.b16 %v1152, %v1151
    %v1162 = vpack.c.b16 %v1154, %v1153
    %1171 = vmatprep.subr.bf16.mxu0 0
    %1172 = vmatpush1.bf16.msra.mxu0 %v1155
    %1173 = vmatprep.subr.bf16.mxu0 0
    %1174 = vmatpush1.bf16.msra.mxu0 %v1156
    %1175 = vmatprep.subr.bf16.mxu0 0
    %1176 = vmatpush1.bf16.msra.mxu0 %v1157
    %1177 = vmatprep.subr.bf16.mxu0 0
    %1178 = vmatpush1.bf16.msra.mxu0 %v1158
    %1179 = vmatprep.subr.bf16.mxu0 0
    %1180 = vmatpush1.bf16.msra.mxu0 %v1159
    %1181 = vmatprep.subr.bf16.mxu0 0
    %1182 = vmatpush1.bf16.msra.mxu0 %v1160
    %1183 = vmatprep.subr.bf16.mxu0 0
    %1184 = vmatpush1.bf16.msra.mxu0 %v1161
    %1185 = vmatprep.subr.bf16.mxu0 0
    %1186 = vmatpush1.bf16.msra.mxu0 %v1162
    %1187 = vmatprep.subr.bf16.mxu0 0
    %1188 = vmatpush1.bf16.msra.mxu0 0
    %1189 = vmatprep.subr.bf16.mxu0 0
    %1190 = vmatpush1.bf16.msra.mxu0 0
    %1191 = vmatprep.subr.bf16.mxu0 0
    %1192 = vmatpush1.bf16.msra.mxu0 0
    %1193 = vmatprep.subr.bf16.mxu0 0
    %1194 = vmatpush1.bf16.msra.mxu0 0
    %1195 = vmatprep.subr.bf16.mxu0 0
    %1196 = vmatpush1.bf16.msra.mxu0 0
    %1197 = vmatprep.subr.bf16.mxu0 0
    %1198 = vmatpush1.bf16.msra.mxu0 0
    %1199 = vmatprep.subr.bf16.mxu0 0
    %1200 = vmatpush1.bf16.msra.mxu0 0
    %1201 = vmatprep.subr.bf16.mxu0 0
    %1202 = vmatpush1.bf16.msra.mxu0 0
    %1203 = vmatprep.mubr.bf16.mxu0 0
    %1204 = vmatmul.mubr.bf16.gmra.mrb[0].mxu0 %v1099
    %v1205 = vpop.f32.mrb[0].mxu0
    %v1206 = vadd.f32 %v1121, %v1205
    %v1207 = vpop.f32.mrb[0].mxu0
    %v1208 = vpop.f32.mrb[0].mxu0
    %v1209 = vpop.f32.mrb[0].mxu0
    %1210 = vdwg.mxu0
    %v1211 = vmax.f32 %v1206, 0.0
    %v1212 = vpack.c.bf16 %v1211, %v1211
    %v1213 = vld [vmem:[#allocation11] sm:$0xf]
    %v1214 = vld [vmem:[#allocation11 + $0x4] sm:$0xf]
    %v1215 = vld [vmem:[#allocation11 + $0x8] sm:$0xf]
    %v1216 = vld [vmem:[#allocation11 + $0xc] sm:$0xf]
    %v1217 = vld [vmem:[#allocation11 + $0x10] sm:$0xf]
    %v1218 = vld [vmem:[#allocation11 + $0x14] sm:$0xf]
    %v1219 = vld [vmem:[#allocation11 + $0x18] sm:$0xf]
    %v1220 = vld [vmem:[#allocation11 + $0x1c] sm:$0xf]
    %v1221 = vld [vmem:[#allocation11 + $0x20] sm:$0xf]
    %v1222 = vld [vmem:[#allocation11 + $0x24] sm:$0xf]
    %v1223 = vld [vmem:[#allocation11 + $0x28] sm:$0xf]
    %v1224 = vld [vmem:[#allocation11 + $0x2c] sm:$0xf]
    %v1225 = vld [vmem:[#allocation11 + $0x30] sm:$0xf]
    %v1226 = vld [vmem:[#allocation11 + $0x34] sm:$0xf]
    %v1227 = vld [vmem:[#allocation11 + $0x38] sm:$0xf]
    %v1228 = vld [vmem:[#allocation11 + $0x3c] sm:$0xf]
    %v1229 = vld [vmem:[%s10] sm:$0x1]
    %v1231 = vlaneseq
    %v1232 = vshrl.u32 %v1231, 7
    %v1233 = vsub.s32 0, %v1232
    %v1234 = vrot.slane %v1229, %v1233
    %v1252 = vunpack.c.l.b16 %v1213
    %v1253 = vunpack.c.l.b16 %v1214
    %v1254 = vunpack.c.l.b16 %v1215
    %v1255 = vunpack.c.l.b16 %v1216
    %v1256 = vunpack.c.l.b16 %v1217
    %v1257 = vunpack.c.l.b16 %v1218
    %v1258 = vunpack.c.l.b16 %v1219
    %v1259 = vunpack.c.l.b16 %v1220
    %v1260 = vunpack.c.l.b16 %v1221
    %v1261 = vunpack.c.l.b16 %v1222
    %v1262 = vunpack.c.l.b16 %v1223
    %v1263 = vunpack.c.l.b16 %v1224
    %v1264 = vunpack.c.l.b16 %v1225
    %v1265 = vunpack.c.l.b16 %v1226
    %v1266 = vunpack.c.l.b16 %v1227
    %v1267 = vunpack.c.l.b16 %v1228
    %v1268 = vpack.c.b16 %v1253, %v1252
    %v1269 = vpack.c.b16 %v1255, %v1254
    %v1270 = vpack.c.b16 %v1257, %v1256
    %v1271 = vpack.c.b16 %v1259, %v1258
    %v1272 = vpack.c.b16 %v1261, %v1260
    %v1273 = vpack.c.b16 %v1263, %v1262
    %v1274 = vpack.c.b16 %v1265, %v1264
    %v1275 = vpack.c.b16 %v1267, %v1266
    %1284 = vmatprep.subr.bf16.mxu0 0
    %1285 = vmatpush1.bf16.msra.mxu0 %v1268
    %1286 = vmatprep.subr.bf16.mxu0 0
    %1287 = vmatpush1.bf16.msra.mxu0 %v1269
    %1288 = vmatprep.subr.bf16.mxu0 0
    %1289 = vmatpush1.bf16.msra.mxu0 %v1270
    %1290 = vmatprep.subr.bf16.mxu0 0
    %1291 = vmatpush1.bf16.msra.mxu0 %v1271
    %1292 = vmatprep.subr.bf16.mxu0 0
    %1293 = vmatpush1.bf16.msra.mxu0 %v1272
    %1294 = vmatprep.subr.bf16.mxu0 0
    %1295 = vmatpush1.bf16.msra.mxu0 %v1273
    %1296 = vmatprep.subr.bf16.mxu0 0
    %1297 = vmatpush1.bf16.msra.mxu0 %v1274
    %1298 = vmatprep.subr.bf16.mxu0 0
    %1299 = vmatpush1.bf16.msra.mxu0 %v1275
    %1300 = vmatprep.subr.bf16.mxu0 0
    %1301 = vmatpush1.bf16.msra.mxu0 0
    %1302 = vmatprep.subr.bf16.mxu0 0
    %1303 = vmatpush1.bf16.msra.mxu0 0
    %1304 = vmatprep.subr.bf16.mxu0 0
    %1305 = vmatpush1.bf16.msra.mxu0 0
    %1306 = vmatprep.subr.bf16.mxu0 0
    %1307 = vmatpush1.bf16.msra.mxu0 0
    %1308 = vmatprep.subr.bf16.mxu0 0
    %1309 = vmatpush1.bf16.msra.mxu0 0
    %1310 = vmatprep.subr.bf16.mxu0 0
    %1311 = vmatpush1.bf16.msra.mxu0 0
    %1312 = vmatprep.subr.bf16.mxu0 0
    %1313 = vmatpush1.bf16.msra.mxu0 0
    %1314 = vmatprep.subr.bf16.mxu0 0
    %1315 = vmatpush1.bf16.msra.mxu0 0
    %1316 = vmatprep.mubr.bf16.mxu0 0
    %1317 = vmatmul.mubr.bf16.gmra.mrb[0].mxu0 %v1212
    %v1318 = vpop.f32.mrb[0].mxu0
    %v1319 = vadd.f32 %v1234, %v1318
    %v1320 = vpop.f32.mrb[0].mxu0
    %v1321 = vpop.f32.mrb[0].mxu0
    %v1322 = vpop.f32.mrb[0].mxu0
    %1323 = vdwg.mxu0
    %1324 = vst [vmem:[#allocation16] sm:$0x3] %v1319
    // Predicated region
    $region70: #{tpu_custom_call.1} parent=1 // pred_check
      _
    $region71: #{tpu_custom_call.1} parent=1 // pred_check_branch
      %1326 = sbr.rel (0) target = $region73
    $region72: #{tpu_custom_call.1} parent=1 // pred_region
      %s1328 = ssub.s32 32, 32
      %1329 = vsyncadd [#allocation4], %s1328
      %s1331 = sshll.u32 [#allocation13], 4
      %s1332 = int_to_ptr.vmem [resolvable:$true] %s1331
      %1334 = dma.vmem_to_hbm [thread:$0]  %s1332, 32, %s11, [#allocation4]
    $region73: #{tpu_custom_call.1} parent=1 // pred_fallthru
      _
    // Predicated region
    $region74: #{tpu_custom_call.1} parent=1 // pred_check
      _
    $region75: #{tpu_custom_call.1} parent=1 // pred_check_branch
      %1336 = sbr.rel (0) target = $region77
    $region76: #{tpu_custom_call.1} parent=1 // pred_region
      %s1338 = ssub.s32 32, 32
      %1339 = vsyncadd [#allocation15], %s1338
      %s1341 = sshll.u32 [#allocation14], 4
      %s1342 = int_to_ptr.vmem [resolvable:$true] %s1341
      %1344 = dma.vmem_to_hbm [thread:$0]  %s1342, 32, %s12, [#allocation15]
    $region77: #{tpu_custom_call.1} parent=1 // pred_fallthru
      _
    // Predicated region
    $region78: #{tpu_custom_call.1} parent=1 // pred_check
      _
    $region79: #{tpu_custom_call.1} parent=1 // pred_check_branch
      %1346 = sbr.rel (0) target = $region81
    $region80: #{tpu_custom_call.1} parent=1 // pred_region
      %s1348 = ssub.s32 32, 32
      %1349 = vsyncadd [#allocation15], %s1348
      %s1351 = sshll.u32 [#allocation16], 4
      %s1352 = int_to_ptr.vmem [resolvable:$true] %s1351
      %1354 = dma.vmem_to_hbm [thread:$0]  %s1352, 32, %s13, [#allocation15]
    $region81: #{tpu_custom_call.1} parent=1 // pred_fallthru
      _
    // Predicated region
    $region82: #{tpu_custom_call.1} parent=1 // pred_check
      _
    $region83: #{tpu_custom_call.1} parent=1 // pred_check_branch
      %1356 = sbr.rel (0) target = $region85
    $region84: #{tpu_custom_call.1} parent=1 // pred_region
      %1357 = dma.done [#allocation4], 32
    $region85: #{tpu_custom_call.1} parent=1 // pred_fallthru
      _
    // Predicated region
    $region86: #{tpu_custom_call.1} parent=1 // pred_check
      _
    $region87: #{tpu_custom_call.1} parent=1 // pred_check_branch
      %1359 = sbr.rel (0) target = $region89
    $region88: #{tpu_custom_call.1} parent=1 // pred_region
      %1360 = dma.done [#allocation15], 32
    $region89: #{tpu_custom_call.1} parent=1 // pred_fallthru
      _
    // Predicated region
    $region90: #{tpu_custom_call.1} parent=1 // pred_check
      _
    $region91: #{tpu_custom_call.1} parent=1 // pred_check_branch
      %1362 = sbr.rel (0) target = $region93
    $region92: #{tpu_custom_call.1} parent=1 // pred_region
      %1363 = dma.done [#allocation15], 32
    $region93: #{tpu_custom_call.1} parent=1 // pred_fallthru
      _
    %1364 = vsyncpa [#allocation3], 1
    %1365 = vsyncpa [#allocation6], 1
    %1366 = vsyncpa [#allocation9], 1
    %1367 = vsyncpa [#allocation12], 1
    %1368 = vsyncpa [#allocation4], 1
    %1369 = vsyncpa [#allocation15], 1

</llo_original>
